<compile_context>
chip_gen: v5e
topology: v5e:2x2
jax: 0.10.0
libtpu: 0.0.40
codegen_flags: <defaults>
</compile_context>

<pallas_src>
import functools
import numbers

import jax
import jax.numpy as jnp
from jax.experimental import pallas as pl
from jax.experimental.pallas import tpu as pltpu

# Below this many bytes the pallas_call boundary + lost producer fusion loses
# on every TPU generation; let XLA fuse the FMA instead.
_MIN_PALLAS_BYTES = 4 * 1024 * 1024
# At least ~4 grid steps per TensorCore on a 2-TC chip for pipeline overlap.
_MIN_GRID_STEPS = 8
# Candidate lane widths (multiples of 128) for the flattened layout, widest first.
_LANE_WIDTHS = (8192, 4096, 2048, 1024, 512, 256, 128)


# ---------------------------------------------------------------------------
# Kernels (pure VPU elementwise, HBM-bandwidth bound)
# ---------------------------------------------------------------------------
def _add_kernel(bpp_ref, cd_ref, out_ref):
    # lam == 1: total = cd_loss + bpp
    out_ref[...] = (cd_ref[...] + bpp_ref[...]).astype(out_ref.dtype)


def _fma_const_kernel(lam, bpp_ref, cd_ref, out_ref):
    # Static lam baked into the trace; constant kept in the tile dtype so
    # bf16 inputs never promote to f32.
    lam_c = jnp.asarray(lam, cd_ref.dtype)
    out_ref[...] = (cd_ref[...] * lam_c + bpp_ref[...]).astype(out_ref.dtype)


def _fma_smem_kernel(lam_ref, bpp_ref, cd_ref, out_ref):
    # Traced lam: one (1,1) f32 SMEM scalar, cast once, tile stays in dtype.
    lam = lam_ref[0, 0].astype(cd_ref.dtype)
    out_ref[...] = (cd_ref[...] * lam + bpp_ref[...]).astype(out_ref.dtype)


# ---------------------------------------------------------------------------
# Tiling helpers
# ---------------------------------------------------------------------------
def _round_up(x: int, m: int) -> int:
    return ((x + m - 1) // m) * m


def _vmem_capacity_bytes() -> int:
    try:
        cap = getattr(pltpu.get_tpu_info(), "vmem_capacity_bytes", None)
        if cap:
            return int(cap)
    except Exception:
        pass
    return 64 * 1024 * 1024  # conservative default (v7x per-TC VMEM)


def _pick_lane_width(n: int):
    """Largest multiple-of-128 lane width that divides the flat element count."""
    for c in _LANE_WIDTHS:
        if n % c == 0:
            return c
    return None


def _pick_row_tile(rows: int, row_bytes: int, row_align: int, per_tile_bytes: int) -> int:
    """Row tile: as big as the per-tile byte budget allows, but small enough to
    leave >= _MIN_GRID_STEPS grid steps; always a multiple of the sublane-packing
    alignment so the block shape satisfies the (8, 128) constraint."""
    max_tr = max(row_align, (per_tile_bytes // max(row_bytes, 1)) // row_align * row_align)
    want_tr = _round_up(pl.cdiv(rows, _MIN_GRID_STEPS), row_align)
    return max(row_align, min(max_tr, want_tr, _round_up(rows, row_align)))


# ---------------------------------------------------------------------------
# Wrapper
# ---------------------------------------------------------------------------
def _total_loss(bpp, cd_loss, lam):
    lam_static = float(lam) if isinstance(lam, numbers.Number) else None

    bpp_a = jnp.asarray(bpp)
    cd_a = jnp.asarray(cd_loss)

    def _fallback():
        # Tiny / ragged / mixed-dtype losses: plain jnp so XLA fuses with producers.
        if lam_static == 1.0:
            return cd_a + bpp_a
        return lam * cd_a + bpp_a

    if (
        bpp_a.shape != cd_a.shape
        or bpp_a.dtype != cd_a.dtype
        or not jnp.issubdtype(bpp_a.dtype, jnp.floating)
    ):
        return _fallback()

    dtype = bpp_a.dtype
    itemsize = jnp.dtype(dtype).itemsize
    n = bpp_a.size
    if n * itemsize < _MIN_PALLAS_BYTES:
        return _fallback()

    lane = _pick_lane_width(n)
    if lane is None:
        # TODO(synk): pad flat sizes with n % 128 != 0 instead of falling back.
        return _fallback()

    rows = n // lane
    # Sublane packing alignment: 8 rows for 32-bit, 16 for 16-bit dtypes.
    row_align = 8 * max(1, 4 // itemsize)

    # Per-generation VMEM budgeting: 2 inputs + 1 output, double-buffered = 6 tiles.
    vmem_cap = _vmem_capacity_bytes()
    working_budget = min(vmem_cap // 4, 24 * 1024 * 1024)
    per_tile_bytes = max(working_budget // 6, 256 * 1024)
    vmem_limit = int(min(vmem_cap // 2, working_budget + (8 << 20)))

    tr = _pick_row_tile(rows, lane * itemsize, row_align, per_tile_bytes)
    grid = (pl.cdiv(rows, tr),)  # ragged last block is masked by Pallas
    tile_spec = pl.BlockSpec((tr, lane), lambda i: (i, 0))

    orig_shape = bpp_a.shape
    bpp2 = bpp_a.reshape(rows, lane)
    cd2 = cd_a.reshape(rows, lane)

    params = pltpu.CompilerParams(
        dimension_semantics=("parallel",),
        vmem_limit_bytes=vmem_limit,
    )
    cost = pl.CostEstimate(
        flops=(1 if lam_static == 1.0 else 2) * n,
        transcendentals=0,
        bytes_accessed=3 * n * itemsize,
    )
    out_shape = jax.ShapeDtypeStruct((rows, lane), dtype)

    if lam_static == 1.0:
        total2 = pl.pallas_call(
            _add_kernel,
            out_shape=out_shape,
            grid_spec=pl.GridSpec(grid=grid, in_specs=[tile_spec, tile_spec],
                                  out_specs=tile_spec),
            compiler_params=params,
            cost_estimate=cost,
        )(bpp2, cd2)
    elif lam_static is not None:
        total2 = pl.pallas_call(
            functools.partial(_fma_const_kernel, lam_static),
            out_shape=out_shape,
            grid_spec=pl.GridSpec(grid=grid, in_specs=[tile_spec, tile_spec],
                                  out_specs=tile_spec),
            compiler_params=params,
            cost_estimate=cost,
        )(bpp2, cd2)
    else:
        lam_arr = jnp.asarray(lam, jnp.float32).reshape(1, 1)
        total2 = pl.pallas_call(
            _fma_smem_kernel,
            out_shape=out_shape,
            grid_spec=pl.GridSpec(
                grid=grid,
                in_specs=[
                    pl.BlockSpec(memory_space=pltpu.MemorySpace.SMEM),  # lam scalar
                    tile_spec,
                    tile_spec,
                ],
                out_specs=tile_spec,
            ),
            compiler_params=params,
            cost_estimate=cost,
        )(lam_arr, bpp2, cd2)

    return total2.reshape(orig_shape)


def get_loss(bpp, cd_loss, lam=1.0):
    """Returns (lam * cd_loss + bpp, cd_loss, bpp), matching the nn.Module."""
    total = _total_loss(bpp, cd_loss, lam)
    # cd_loss and bpp are identity pass-throughs in the PyTorch module.
    return total, cd_loss, bpp


# ---------------------------------------------------------------------------
# Demo / self-check
# ---------------------------------------------------------------------------
if __name__ == "__main__":
    key = jax.random.PRNGKey(0)
    k1, k2, k3, k4 = jax.random.split(key, 4)

    # Small per-element loss maps (batch=2, channels=4, 16x16): intentionally
    # below the Pallas threshold -> fused jnp path (the right call for tiny data).
    small_shape = (2, 4, 16, 16)
    sb = jax.random.uniform(k1, small_shape, dtype=jnp.float32)
    sc = jax.random.uniform(k2, small_shape, dtype=jnp.float32)
    st, sc_out, sb_out = get_loss(sb, sc, lam=2.0)
    jax.block_until_ready(st)
    assert jnp.allclose(st, 2.0 * sc + sb, atol=1e-6)
    assert jnp.array_equal(sc_out, sc) and jnp.array_equal(sb_out, sb)

    # Large rate / distortion maps -> Pallas streaming kernel.
    # 8*384*512 = 1.57M f32 elems (6 MiB), flattened to a lane-dense (192, 8192)
    # slab; row tile ~24 rows -> 8 parallel grid steps.
    big_shape = (8, 384, 512)
    bpp = jax.random.uniform(k3, big_shape, dtype=jnp.float32)
    cd = jax.random.uniform(k4, big_shape, dtype=jnp.float32)

    t1, _, _ = get_loss(bpp, cd)                                   # lam == 1 -> add kernel
    t2, _, _ = get_loss(bpp, cd, lam=0.5)                          # static lam -> baked FMA
    t3, _, _ = get_loss(bpp, cd, lam=jnp.asarray(0.25, jnp.float32))  # traced lam -> SMEM FMA
    jax.block_until_ready((t1, t2, t3))

    assert jnp.allclose(t1, cd + bpp, atol=1e-6), "mismatch (lam=1)"
    assert jnp.allclose(t2, 0.5 * cd + bpp, atol=1e-6), "mismatch (lam=0.5)"
    assert jnp.allclose(t3, 0.25 * cd + bpp, atol=1e-6), "mismatch (traced lam)"

    # Typical PyTorch usage: 0-D scalar losses -> fused jnp fast path.
    zt, _, _ = get_loss(jnp.float32(0.25), jnp.float32(0.75), lam=2.0)
    jax.block_until_ready(zt)
    assert jnp.allclose(zt, 2.0 * 0.75 + 0.25, atol=1e-6)

    print("KERNEL_OK")
</pallas_src>

<mosaic_0001>
module attributes {stable_mosaic.version = 11 : i64} {
  func.func @_add_kernel(%arg0: i32, %arg1: memref<24x8192xf32, #tpu.memory_space<vmem>>, %arg2: memref<24x8192xf32, #tpu.memory_space<vmem>>, %arg3: memref<24x8192xf32, #tpu.memory_space<vmem>>) attributes {dimension_semantics = [#tpu.dimension_semantics<parallel>], iteration_bounds = array<i64: 8>, scalar_prefetch = 0 : i64, scratch_operands = 0 : i64, tpu.core_type = #tpu.core_type<tc>, window_params = [{transform_indices = @transform_0, window_bounds = array<i64: 24, 8192>}, {transform_indices = @transform_1, window_bounds = array<i64: 24, 8192>}, {transform_indices = @transform_2, window_bounds = array<i64: 24, 8192>}]} {
    %c0 = arith.constant 0 : index
    %c0_0 = arith.constant 0 : index
    %0 = vector.load %arg2[%c0, %c0_0] : memref<24x8192xf32, #tpu.memory_space<vmem>>, vector<24x8192xf32>
    %c0_1 = arith.constant 0 : index
    %c0_2 = arith.constant 0 : index
    %1 = vector.load %arg1[%c0_1, %c0_2] : memref<24x8192xf32, #tpu.memory_space<vmem>>, vector<24x8192xf32>
    %2 = arith.addf %0, %1 : vector<24x8192xf32>
    %c0_3 = arith.constant 0 : index
    %c0_4 = arith.constant 0 : index
    %3 = vector.load %arg3[%c0_3, %c0_4] : memref<24x8192xf32, #tpu.memory_space<vmem>>, vector<24x8192xf32>
    tpu.vector_store %arg3[%c0_3, %c0_4], %2 {strides = array<i32>} : memref<24x8192xf32, #tpu.memory_space<vmem>>, vector<24x8192xf32>,
    return
  }
  func.func @transform_0(%arg0: i32) -> (i32, i32) {
    %c0_i32 = arith.constant 0 : i32
    %c0_i32_0 = arith.constant 0 : i32
    return %arg0, %c0_i32 : i32, i32
  }
  func.func @transform_1(%arg0: i32) -> (i32, i32) {
    %c0_i32 = arith.constant 0 : i32
    %c0_i32_0 = arith.constant 0 : i32
    return %arg0, %c0_i32 : i32, i32
  }
  func.func @transform_2(%arg0: i32) -> (i32, i32) {
    %c0_i32 = arith.constant 0 : i32
    %c0_i32_0 = arith.constant 0 : i32
    return %arg0, %c0_i32 : i32, i32
  }
}

</mosaic_0001>

<llo_original>
// kernel: tpu_custom_call.1
$region0: #{tpu_custom_call.1}
  #allocation0 [shape = 'u32[]', space=smem, size = 0x4, offset = 0x4, fixed_abs, tag = 'smem constant byte address 0x4 - core index']
  #allocation1 [shape = 'u32[72,128]{1,0:T(1,128)}', space=vmem, size = 0x9000, scoped, tag = 'internal scratch']
  %s0 = inlined_call_operand.hbm [shape: f32[192,8192], index: 0, kind: input, shape index: {}]
  %s1 = inlined_call_operand.hbm [shape: f32[192,8192], index: 1, kind: input, shape index: {}]
  %s2 = inlined_call_operand.hbm [shape: f32[192,8192], index: 2, kind: output, shape index: {}]
  %s3 = sld [smem:[#allocation0]]
  $region49: #{tpu_custom_call.1} parent=0
    _
  %s5 = ssub.s32 1, %s3
  %s6 = scalar_select 0, %s5, %s3
  $region1: #{tpu_custom_call.1} parent=0
    #allocation2 [shape = 'u8[1572864]{0}', space=vmem, size = 0x180000, scoped, tag = 'input window, operand 0']
    #allocation3 [shape = 's32[2]{0}', space=sflag, size = 0x8, scoped, tag = 'scoped memory for tpu_custom_call.1']
    #allocation4 [shape = 's32[2]{0}', space=sflag, size = 0x8, scoped, tag = 'scoped memory for tpu_custom_call.1']
    #allocation5 [shape = 'u8[1572864]{0}', space=vmem, size = 0x180000, scoped, tag = 'input window, operand 1']
    #allocation6 [shape = 's32[2]{0}', space=sflag, size = 0x8, scoped, tag = 'scoped memory for tpu_custom_call.1']
    #allocation7 [shape = 'u8[1572864]{0}', space=vmem, size = 0x180000, scoped, tag = 'output window, operand 0']
    %7 = vsyncpa [#allocation3], 0
    %s8 = scalar_lea.sflag [#allocation3], 1
    %9 = vsyncpa %s8, 0
    %10 = vsyncpa [#allocation6], 0
    %s11 = scalar_lea.sflag [#allocation6], 1
    %12 = vsyncpa %s11, 0
    %13 = vsyncpa [#allocation4], 0
    %s14 = scalar_lea.sflag [#allocation4], 1
    %15 = vsyncpa %s14, 0
    loop: start=0, step=1, limit=10
    $region2: #{tpu_custom_call.1} parent=1 // loop_pre_header
      _
    $region3: #{tpu_custom_call.1} parent=1 // loop_header
      %s17 = sphi 0, %s21
      %p18 = scmp.ge.s32.totalorder %s17, 10
      %s27 = sphi 0, %s29
      %s30 = sphi 0, %s27
      %s31 = sphi 0, %s30
      %s47 = sphi 0, %s31
      %s53 = sphi 0, %s55
      %s56 = sphi 0, %s53
      %s57 = sphi 0, %s56
      %s73 = sphi 0, %s57
      %s79 = sphi 0, %s81
      %s82 = sphi 0, %s79
      %s83 = sphi 0, %s82
      %s99 = sphi 0, %s83
    $region4: #{tpu_custom_call.1} parent=1 // loop_header_branch
      %20 = sbr.rel (%p18) target = $region8
    $region5: #{tpu_custom_call.1} parent=1 // loop_body
      %s22 = ssub.s32 %s17, 1
      %s23 = ssub.s32 %s17, 2
      %s24 = sadd.s32 %s17, 1
      %s25 = ssub.s32 %s17, %s24
      %p26 = scmp.eq.s32.totalorder %s25, 0
      %s28 = sadd.s32 %s27, 1
      %s29 = scalar_select %p26, %s27, %s28
      %p32 = pneg %p26
      %p33 = scmp.eq.s32.totalorder %s17, 7
      %p34 = por %p32, %p33
      %p35 = scmp.ne.s32.totalorder %s27, %s30
      %p36 = scmp.eq.s32.totalorder %s17, 0
      %p37 = por %p35, %p36
      %p38 = scmp.ne.s32.totalorder %s27, %s30
      %p39 = scmp.eq.s32.totalorder %s22, 7
      %p40 = por %p38, %p39
      %p41 = scmp.ne.s32.totalorder %s30, %s31
      %p42 = scmp.eq.s32.totalorder %s22, 0
      %p43 = por %p41, %p42
      %p44 = scmp.ne.s32.totalorder %s30, %s31
      %p45 = scmp.eq.s32.totalorder %s23, 7
      %p46 = por %p44, %p45
      %p48 = scmp.ne.s32.totalorder %s31, %s47
      %p49 = scmp.eq.s32.totalorder %s23, 0
      %p50 = por %p48, %p49
      %s51 = ssub.s32 %s17, %s24
      %p52 = scmp.eq.s32.totalorder %s51, 0
      %s54 = sadd.s32 %s53, 1
      %s55 = scalar_select %p52, %s53, %s54
      %p58 = pneg %p52
      %p59 = scmp.eq.s32.totalorder %s17, 7
      %p60 = por %p58, %p59
      %p61 = scmp.ne.s32.totalorder %s53, %s56
      %p62 = scmp.eq.s32.totalorder %s17, 0
      %p63 = por %p61, %p62
      %p64 = scmp.ne.s32.totalorder %s53, %s56
      %p65 = scmp.eq.s32.totalorder %s22, 7
      %p66 = por %p64, %p65
      %p67 = scmp.ne.s32.totalorder %s56, %s57
      %p68 = scmp.eq.s32.totalorder %s22, 0
      %p69 = por %p67, %p68
      %p70 = scmp.ne.s32.totalorder %s56, %s57
      %p71 = scmp.eq.s32.totalorder %s23, 7
      %p72 = por %p70, %p71
      %p74 = scmp.ne.s32.totalorder %s57, %s73
      %p75 = scmp.eq.s32.totalorder %s23, 0
      %p76 = por %p74, %p75
      %s77 = ssub.s32 %s17, %s24
      %p78 = scmp.eq.s32.totalorder %s77, 0
      %s80 = sadd.s32 %s79, 1
      %s81 = scalar_select %p78, %s79, %s80
      %p84 = pneg %p78
      %p85 = scmp.eq.s32.totalorder %s17, 7
      %p86 = por %p84, %p85
      %p87 = scmp.ne.s32.totalorder %s79, %s82
      %p88 = scmp.eq.s32.totalorder %s17, 0
      %p89 = por %p87, %p88
      %p90 = scmp.ne.s32.totalorder %s79, %s82
      %p91 = scmp.eq.s32.totalorder %s22, 7
      %p92 = por %p90, %p91
      %p93 = scmp.ne.s32.totalorder %s82, %s83
      %p94 = scmp.eq.s32.totalorder %s22, 0
      %p95 = por %p93, %p94
      %p96 = scmp.ne.s32.totalorder %s82, %s83
      %p97 = scmp.eq.s32.totalorder %s23, 7
      %p98 = por %p96, %p97
      %p100 = scmp.ne.s32.totalorder %s83, %s99
      %p101 = scmp.eq.s32.totalorder %s23, 0
      %p102 = por %p100, %p101
      %p103 = scmp.le.s32.totalorder 1, %s17
      %p104 = scmp.lt.s32.totalorder %s17, 9
      %p105 = pnand %p103, %p104
      %p106 = pneg %p105
      // Predicated region
      $region9: #{tpu_custom_call.1} parent=5 // pred_check
        _
      $region10: #{tpu_custom_call.1} parent=5 // pred_check_branch
        %108 = sbr.rel (%p105) target = $region12
      $region11: #{tpu_custom_call.1} parent=5 // pred_region
        %s109 = ssub.s32 %s17, 1
      $region12: #{tpu_custom_call.1} parent=5 // pred_fallthru
        _
      %p110 = scmp.lt.s32.totalorder %s17, 8
      // Predicated region
      $region13: #{tpu_custom_call.1} parent=5 // pred_check
        %p111 = pneg %p110
      $region14: #{tpu_custom_call.1} parent=5 // pred_check_branch
        %113 = sbr.rel (%p111) target = $region16
      $region15: #{tpu_custom_call.1} parent=5 // pred_region
        // Predicated region
        $region17: #{tpu_custom_call.1} parent=15 // pred_check
          %p114 = pneg %p37
        $region18: #{tpu_custom_call.1} parent=15 // pred_check_branch
          %116 = sbr.rel (%p114) target = $region20
        $region19: #{tpu_custom_call.1} parent=15 // pred_region
          %s117 = sand.u32 %s27, 1
          %s118 = scalar_lea.sflag [#allocation3], %s117
          %s119 = sand.u32 %s27, 1
          %s120 = smul.addr %s119, 1536
          %s121 = scalar_lea.vmem [#allocation2], %s120
          %s122 = smul.u32 3, %s17
          %124 = vsyncadd %s118, 0
          %s125 = smul.addr %s122, 64
          %s126 = smul.addr %s125, 8
          %s127 = scalar_lea.hbm %s0, %s126
          %s128 = sshll.u32 %s127, 4
          %s129 = int_to_ptr.hbm [resolvable:$true] %s128
          %s130 = sshll.u32 %s121, 4
          %s131 = int_to_ptr.vmem [resolvable:$true] %s130
          %136 = dma.hbm_to_vmem [thread:$0]  %s129, 24576, %s131, %s118, 8192, 8192, 512
        $region20: #{tpu_custom_call.1} parent=15 // pred_fallthru
          _
        // Predicated region
        $region21: #{tpu_custom_call.1} parent=15 // pred_check
          %p137 = pneg %p63
        $region22: #{tpu_custom_call.1} parent=15 // pred_check_branch
          %139 = sbr.rel (%p137) target = $region24
        $region23: #{tpu_custom_call.1} parent=15 // pred_region
          %s140 = sand.u32 %s53, 1
          %s141 = scalar_lea.sflag [#allocation6], %s140
          %s142 = sand.u32 %s53, 1
          %s143 = smul.addr %s142, 1536
          %s144 = scalar_lea.vmem [#allocation5], %s143
          %s145 = smul.u32 3, %s17
          %147 = vsyncadd %s141, 0
          %s148 = smul.addr %s145, 64
          %s149 = smul.addr %s148, 8
          %s150 = scalar_lea.hbm %s1, %s149
          %s151 = sshll.u32 %s150, 4
          %s152 = int_to_ptr.hbm [resolvable:$true] %s151
          %s153 = sshll.u32 %s144, 4
          %s154 = int_to_ptr.vmem [resolvable:$true] %s153
          %159 = dma.hbm_to_vmem [thread:$0]  %s152, 24576, %s154, %s141, 8192, 8192, 512
        $region24: #{tpu_custom_call.1} parent=15 // pred_fallthru
          _
      $region16: #{tpu_custom_call.1} parent=5 // pred_fallthru
        _
      %p160 = scmp.le.s32.totalorder 1, %s17
      %p161 = scmp.lt.s32.totalorder %s17, 9
      %p162 = pnand %p160, %p161
      %p163 = pneg %p162
      // Predicated region
      $region25: #{tpu_custom_call.1} parent=5 // pred_check
        _
      $region26: #{tpu_custom_call.1} parent=5 // pred_check_branch
        %165 = sbr.rel (%p162) target = $region28
      $region27: #{tpu_custom_call.1} parent=5 // pred_region
        %s166 = ssub.s32 %s17, 1
        %s167 = sand.u32 %s30, 1
        %s168 = scalar_lea.sflag [#allocation3], %s167
        %s169 = sand.u32 %s30, 1
        %s170 = smul.addr %s169, 1536
        %s171 = scalar_lea.vmem [#allocation2], %s170
        // Predicated region
        $region29: #{tpu_custom_call.1} parent=27 // pred_check
          %p172 = pneg %p43
        $region30: #{tpu_custom_call.1} parent=27 // pred_check_branch
          %174 = sbr.rel (%p172) target = $region32
        $region31: #{tpu_custom_call.1} parent=27 // pred_region
          %176 = dma.done %s168, 24576
        $region32: #{tpu_custom_call.1} parent=27 // pred_fallthru
          _
        %s177 = sand.u32 %s56, 1
        %s178 = scalar_lea.sflag [#allocation6], %s177
        %s179 = sand.u32 %s56, 1
        %s180 = smul.addr %s179, 1536
        %s181 = scalar_lea.vmem [#allocation5], %s180
        // Predicated region
        $region33: #{tpu_custom_call.1} parent=27 // pred_check
          %p182 = pneg %p69
        $region34: #{tpu_custom_call.1} parent=27 // pred_check_branch
          %184 = sbr.rel (%p182) target = $region36
        $region35: #{tpu_custom_call.1} parent=27 // pred_region
          %186 = dma.done %s178, 24576
        $region36: #{tpu_custom_call.1} parent=27 // pred_fallthru
          _
        %s187 = sand.u32 %s30, 1
        %s188 = scalar_lea.sflag [#allocation3], %s187
        %s189 = sand.u32 %s30, 1
        %s190 = smul.addr %s189, 1536
        %s191 = scalar_lea.vmem [#allocation2], %s190
        %p192 = pneg %p43
        %p193 = pneg %p40
        %s194 = sand.u32 %s56, 1
        %s195 = scalar_lea.sflag [#allocation6], %s194
        %s196 = sand.u32 %s56, 1
        %s197 = smul.addr %s196, 1536
        %s198 = scalar_lea.vmem [#allocation5], %s197
        %p199 = pneg %p69
        %p200 = pneg %p66
        %p201 = pneg %p95
        %p202 = pneg %p92
        %s203 = sand.u32 %s82, 1
        %s204 = scalar_lea.sflag [#allocation4], %s203
        %s205 = sand.u32 %s82, 1
        %s206 = smul.addr %s205, 1536
        %s207 = scalar_lea.vmem [#allocation7], %s206
        %s208 = smul.u32 3, %s22
        %s209 = smul.u32 3, %s22
        %s210 = smul.u32 3, %s22
        %v211 = vld [vmem:[%s181] sm:$0xff]
        %v212 = vld [vmem:[%s181 + $0x8] sm:$0xff]
        %v213 = vld [vmem:[%s181 + $0x10] sm:$0xff]
        %v214 = vld [vmem:[%s181 + $0x18] sm:$0xff]
        %v215 = vld [vmem:[%s181 + $0x20] sm:$0xff]
        %v216 = vld [vmem:[%s181 + $0x28] sm:$0xff]
        %v217 = vld [vmem:[%s181 + $0x30] sm:$0xff]
        %v218 = vld [vmem:[%s181 + $0x38] sm:$0xff]
        %v219 = vld [vmem:[%s181 + $0x40] sm:$0xff]
        %v220 = vld [vmem:[%s181 + $0x48] sm:$0xff]
        %v221 = vld [vmem:[%s181 + $0x50] sm:$0xff]
        %v222 = vld [vmem:[%s181 + $0x58] sm:$0xff]
        %v223 = vld [vmem:[%s181 + $0x60] sm:$0xff]
        %v224 = vld [vmem:[%s181 + $0x68] sm:$0xff]
        %v225 = vld [vmem:[%s181 + $0x70] sm:$0xff]
        %v226 = vld [vmem:[%s181 + $0x78] sm:$0xff]
        %v227 = vld [vmem:[%s181 + $0x80] sm:$0xff]
        %v228 = vld [vmem:[%s181 + $0x88] sm:$0xff]
        %v229 = vld [vmem:[%s181 + $0x90] sm:$0xff]
        %v230 = vld [vmem:[%s181 + $0x98] sm:$0xff]
        %v231 = vld [vmem:[%s181 + $0xa0] sm:$0xff]
        %v232 = vld [vmem:[%s181 + $0xa8] sm:$0xff]
        %v233 = vld [vmem:[%s181 + $0xb0] sm:$0xff]
        %v234 = vld [vmem:[%s181 + $0xb8] sm:$0xff]
        %v235 = vld [vmem:[%s181 + $0xc0] sm:$0xff]
        %v236 = vld [vmem:[%s181 + $0xc8] sm:$0xff]
        %v237 = vld [vmem:[%s181 + $0xd0] sm:$0xff]
        %v238 = vld [vmem:[%s181 + $0xd8] sm:$0xff]
        %v239 = vld [vmem:[%s181 + $0xe0] sm:$0xff]
        %v240 = vld [vmem:[%s181 + $0xe8] sm:$0xff]
        %v241 = vld [vmem:[%s181 + $0xf0] sm:$0xff]
        %v242 = vld [vmem:[%s181 + $0xf8] sm:$0xff]
        %v243 = vld [vmem:[%s181 + $0x100] sm:$0xff]
        %v244 = vld [vmem:[%s181 + $0x108] sm:$0xff]
        %v245 = vld [vmem:[%s181 + $0x110] sm:$0xff]
        %v246 = vld [vmem:[%s181 + $0x118] sm:$0xff]
        %v247 = vld [vmem:[%s181 + $0x120] sm:$0xff]
        %v248 = vld [vmem:[%s181 + $0x128] sm:$0xff]
        %v249 = vld [vmem:[%s181 + $0x130] sm:$0xff]
        %v250 = vld [vmem:[%s181 + $0x138] sm:$0xff]
        %v251 = vld [vmem:[%s181 + $0x140] sm:$0xff]
        %v252 = vld [vmem:[%s181 + $0x148] sm:$0xff]
        %v253 = vld [vmem:[%s181 + $0x150] sm:$0xff]
        %v254 = vld [vmem:[%s181 + $0x158] sm:$0xff]
        %v255 = vld [vmem:[%s181 + $0x160] sm:$0xff]
        %v256 = vld [vmem:[%s181 + $0x168] sm:$0xff]
        %v257 = vld [vmem:[%s181 + $0x170] sm:$0xff]
        %v258 = vld [vmem:[%s181 + $0x178] sm:$0xff]
        %v259 = vld [vmem:[%s181 + $0x180] sm:$0xff]
        %v260 = vld [vmem:[%s181 + $0x188] sm:$0xff]
        %v261 = vld [vmem:[%s181 + $0x190] sm:$0xff]
        %v262 = vld [vmem:[%s181 + $0x198] sm:$0xff]
        %v263 = vld [vmem:[%s181 + $0x1a0] sm:$0xff]
        %v264 = vld [vmem:[%s181 + $0x1a8] sm:$0xff]
        %v265 = vld [vmem:[%s181 + $0x1b0] sm:$0xff]
        %v266 = vld [vmem:[%s181 + $0x1b8] sm:$0xff]
        %v267 = vld [vmem:[%s181 + $0x1c0] sm:$0xff]
        %v268 = vld [vmem:[%s181 + $0x1c8] sm:$0xff]
        %v269 = vld [vmem:[%s181 + $0x1d0] sm:$0xff]
        %v270 = vld [vmem:[%s181 + $0x1d8] sm:$0xff]
        %v271 = vld [vmem:[%s181 + $0x1e0] sm:$0xff]
        %v272 = vld [vmem:[%s181 + $0x1e8] sm:$0xff]
        %v273 = vld [vmem:[%s181 + $0x1f0] sm:$0xff]
        %v274 = vld [vmem:[%s181 + $0x1f8] sm:$0xff]
        %v275 = vld [vmem:[%s181 + $0x200] sm:$0xff]
        %v276 = vld [vmem:[%s181 + $0x208] sm:$0xff]
        %v277 = vld [vmem:[%s181 + $0x210] sm:$0xff]
        %v278 = vld [vmem:[%s181 + $0x218] sm:$0xff]
        %v279 = vld [vmem:[%s181 + $0x220] sm:$0xff]
        %v280 = vld [vmem:[%s181 + $0x228] sm:$0xff]
        %v281 = vld [vmem:[%s181 + $0x230] sm:$0xff]
        %v282 = vld [vmem:[%s181 + $0x238] sm:$0xff]
        %v283 = vld [vmem:[%s181 + $0x240] sm:$0xff]
        %v284 = vld [vmem:[%s181 + $0x248] sm:$0xff]
        %v285 = vld [vmem:[%s181 + $0x250] sm:$0xff]
        %v286 = vld [vmem:[%s181 + $0x258] sm:$0xff]
        %v287 = vld [vmem:[%s181 + $0x260] sm:$0xff]
        %v288 = vld [vmem:[%s181 + $0x268] sm:$0xff]
        %v289 = vld [vmem:[%s181 + $0x270] sm:$0xff]
        %v290 = vld [vmem:[%s181 + $0x278] sm:$0xff]
        %v291 = vld [vmem:[%s181 + $0x280] sm:$0xff]
        %v292 = vld [vmem:[%s181 + $0x288] sm:$0xff]
        %v293 = vld [vmem:[%s181 + $0x290] sm:$0xff]
        %v294 = vld [vmem:[%s181 + $0x298] sm:$0xff]
        %v295 = vld [vmem:[%s181 + $0x2a0] sm:$0xff]
        %v296 = vld [vmem:[%s181 + $0x2a8] sm:$0xff]
        %v297 = vld [vmem:[%s181 + $0x2b0] sm:$0xff]
        %v298 = vld [vmem:[%s181 + $0x2b8] sm:$0xff]
        %v299 = vld [vmem:[%s181 + $0x2c0] sm:$0xff]
        %v300 = vld [vmem:[%s181 + $0x2c8] sm:$0xff]
        %v301 = vld [vmem:[%s181 + $0x2d0] sm:$0xff]
        %v302 = vld [vmem:[%s181 + $0x2d8] sm:$0xff]
        %v303 = vld [vmem:[%s181 + $0x2e0] sm:$0xff]
        %v304 = vld [vmem:[%s181 + $0x2e8] sm:$0xff]
        %v305 = vld [vmem:[%s181 + $0x2f0] sm:$0xff]
        %v306 = vld [vmem:[%s181 + $0x2f8] sm:$0xff]
        %v307 = vld [vmem:[%s181 + $0x300] sm:$0xff]
        %v308 = vld [vmem:[%s181 + $0x308] sm:$0xff]
        %v309 = vld [vmem:[%s181 + $0x310] sm:$0xff]
        %v310 = vld [vmem:[%s181 + $0x318] sm:$0xff]
        %v311 = vld [vmem:[%s181 + $0x320] sm:$0xff]
        %v312 = vld [vmem:[%s181 + $0x328] sm:$0xff]
        %v313 = vld [vmem:[%s181 + $0x330] sm:$0xff]
        %v314 = vld [vmem:[%s181 + $0x338] sm:$0xff]
        %v315 = vld [vmem:[%s181 + $0x340] sm:$0xff]
        %v316 = vld [vmem:[%s181 + $0x348] sm:$0xff]
        %v317 = vld [vmem:[%s181 + $0x350] sm:$0xff]
        %v318 = vld [vmem:[%s181 + $0x358] sm:$0xff]
        %v319 = vld [vmem:[%s181 + $0x360] sm:$0xff]
        %v320 = vld [vmem:[%s181 + $0x368] sm:$0xff]
        %v321 = vld [vmem:[%s181 + $0x370] sm:$0xff]
        %v322 = vld [vmem:[%s181 + $0x378] sm:$0xff]
        %v323 = vld [vmem:[%s181 + $0x380] sm:$0xff]
        %v324 = vld [vmem:[%s181 + $0x388] sm:$0xff]
        %v325 = vld [vmem:[%s181 + $0x390] sm:$0xff]
        %v326 = vld [vmem:[%s181 + $0x398] sm:$0xff]
        %v327 = vld [vmem:[%s181 + $0x3a0] sm:$0xff]
        %v328 = vld [vmem:[%s181 + $0x3a8] sm:$0xff]
        %v329 = vld [vmem:[%s181 + $0x3b0] sm:$0xff]
        %v330 = vld [vmem:[%s181 + $0x3b8] sm:$0xff]
        %v331 = vld [vmem:[%s181 + $0x3c0] sm:$0xff]
        %v332 = vld [vmem:[%s181 + $0x3c8] sm:$0xff]
        %v333 = vld [vmem:[%s181 + $0x3d0] sm:$0xff]
        %v334 = vld [vmem:[%s181 + $0x3d8] sm:$0xff]
        %v335 = vld [vmem:[%s181 + $0x3e0] sm:$0xff]
        %v336 = vld [vmem:[%s181 + $0x3e8] sm:$0xff]
        %v337 = vld [vmem:[%s181 + $0x3f0] sm:$0xff]
        %v338 = vld [vmem:[%s181 + $0x3f8] sm:$0xff]
        %v339 = vld [vmem:[%s181 + $0x400] sm:$0xff]
        %v340 = vld [vmem:[%s181 + $0x408] sm:$0xff]
        %v341 = vld [vmem:[%s181 + $0x410] sm:$0xff]
        %v342 = vld [vmem:[%s181 + $0x418] sm:$0xff]
        %v343 = vld [vmem:[%s181 + $0x420] sm:$0xff]
        %v344 = vld [vmem:[%s181 + $0x428] sm:$0xff]
        %v345 = vld [vmem:[%s181 + $0x430] sm:$0xff]
        %v346 = vld [vmem:[%s181 + $0x438] sm:$0xff]
        %v347 = vld [vmem:[%s181 + $0x440] sm:$0xff]
        %v348 = vld [vmem:[%s181 + $0x448] sm:$0xff]
        %v349 = vld [vmem:[%s181 + $0x450] sm:$0xff]
        %v350 = vld [vmem:[%s181 + $0x458] sm:$0xff]
        %v351 = vld [vmem:[%s181 + $0x460] sm:$0xff]
        %v352 = vld [vmem:[%s181 + $0x468] sm:$0xff]
        %v353 = vld [vmem:[%s181 + $0x470] sm:$0xff]
        %v354 = vld [vmem:[%s181 + $0x478] sm:$0xff]
        %v355 = vld [vmem:[%s181 + $0x480] sm:$0xff]
        %v356 = vld [vmem:[%s181 + $0x488] sm:$0xff]
        %v357 = vld [vmem:[%s181 + $0x490] sm:$0xff]
        %v358 = vld [vmem:[%s181 + $0x498] sm:$0xff]
        %v359 = vld [vmem:[%s181 + $0x4a0] sm:$0xff]
        %v360 = vld [vmem:[%s181 + $0x4a8] sm:$0xff]
        %v361 = vld [vmem:[%s181 + $0x4b0] sm:$0xff]
        %v362 = vld [vmem:[%s181 + $0x4b8] sm:$0xff]
        %v363 = vld [vmem:[%s181 + $0x4c0] sm:$0xff]
        %v364 = vld [vmem:[%s181 + $0x4c8] sm:$0xff]
        %v365 = vld [vmem:[%s181 + $0x4d0] sm:$0xff]
        %v366 = vld [vmem:[%s181 + $0x4d8] sm:$0xff]
        %v367 = vld [vmem:[%s181 + $0x4e0] sm:$0xff]
        %v368 = vld [vmem:[%s181 + $0x4e8] sm:$0xff]
        %v369 = vld [vmem:[%s181 + $0x4f0] sm:$0xff]
        %v370 = vld [vmem:[%s181 + $0x4f8] sm:$0xff]
        %v371 = vld [vmem:[%s181 + $0x500] sm:$0xff]
        %v372 = vld [vmem:[%s181 + $0x508] sm:$0xff]
        %v373 = vld [vmem:[%s181 + $0x510] sm:$0xff]
        %v374 = vld [vmem:[%s181 + $0x518] sm:$0xff]
        %v375 = vld [vmem:[%s181 + $0x520] sm:$0xff]
        %v376 = vld [vmem:[%s181 + $0x528] sm:$0xff]
        %v377 = vld [vmem:[%s181 + $0x530] sm:$0xff]
        %v378 = vld [vmem:[%s181 + $0x538] sm:$0xff]
        %v379 = vld [vmem:[%s181 + $0x540] sm:$0xff]
        %v380 = vld [vmem:[%s181 + $0x548] sm:$0xff]
        %v381 = vld [vmem:[%s181 + $0x550] sm:$0xff]
        %v382 = vld [vmem:[%s181 + $0x558] sm:$0xff]
        %v383 = vld [vmem:[%s181 + $0x560] sm:$0xff]
        %v384 = vld [vmem:[%s181 + $0x568] sm:$0xff]
        %v385 = vld [vmem:[%s181 + $0x570] sm:$0xff]
        %v386 = vld [vmem:[%s181 + $0x578] sm:$0xff]
        %v387 = vld [vmem:[%s181 + $0x580] sm:$0xff]
        %v388 = vld [vmem:[%s181 + $0x588] sm:$0xff]
        %v389 = vld [vmem:[%s181 + $0x590] sm:$0xff]
        %v390 = vld [vmem:[%s181 + $0x598] sm:$0xff]
        %v391 = vld [vmem:[%s181 + $0x5a0] sm:$0xff]
        %v392 = vld [vmem:[%s181 + $0x5a8] sm:$0xff]
        %v393 = vld [vmem:[%s181 + $0x5b0] sm:$0xff]
        %v394 = vld [vmem:[%s181 + $0x5b8] sm:$0xff]
        %v395 = vld [vmem:[%s181 + $0x5c0] sm:$0xff]
        %v396 = vld [vmem:[%s181 + $0x5c8] sm:$0xff]
        %v397 = vld [vmem:[%s181 + $0x5d0] sm:$0xff]
        %v398 = vld [vmem:[%s181 + $0x5d8] sm:$0xff]
        %v399 = vld [vmem:[%s181 + $0x5e0] sm:$0xff]
        %v400 = vld [vmem:[%s181 + $0x5e8] sm:$0xff]
        %v401 = vld [vmem:[%s181 + $0x5f0] sm:$0xff]
        %v402 = vld [vmem:[%s181 + $0x5f8] sm:$0xff]
        %v403 = vld [vmem:[%s171] sm:$0xff]
        %v404 = vld [vmem:[%s171 + $0x8] sm:$0xff]
        %v405 = vld [vmem:[%s171 + $0x10] sm:$0xff]
        %v406 = vld [vmem:[%s171 + $0x18] sm:$0xff]
        %v407 = vld [vmem:[%s171 + $0x20] sm:$0xff]
        %v408 = vld [vmem:[%s171 + $0x28] sm:$0xff]
        %v409 = vld [vmem:[%s171 + $0x30] sm:$0xff]
        %v410 = vld [vmem:[%s171 + $0x38] sm:$0xff]
        %v411 = vld [vmem:[%s171 + $0x40] sm:$0xff]
        %v412 = vld [vmem:[%s171 + $0x48] sm:$0xff]
        %v413 = vld [vmem:[%s171 + $0x50] sm:$0xff]
        %v414 = vld [vmem:[%s171 + $0x58] sm:$0xff]
        %v415 = vld [vmem:[%s171 + $0x60] sm:$0xff]
        %v416 = vld [vmem:[%s171 + $0x68] sm:$0xff]
        %v417 = vld [vmem:[%s171 + $0x70] sm:$0xff]
        %v418 = vld [vmem:[%s171 + $0x78] sm:$0xff]
        %v419 = vld [vmem:[%s171 + $0x80] sm:$0xff]
        %v420 = vld [vmem:[%s171 + $0x88] sm:$0xff]
        %v421 = vld [vmem:[%s171 + $0x90] sm:$0xff]
        %v422 = vld [vmem:[%s171 + $0x98] sm:$0xff]
        %v423 = vld [vmem:[%s171 + $0xa0] sm:$0xff]
        %v424 = vld [vmem:[%s171 + $0xa8] sm:$0xff]
        %v425 = vld [vmem:[%s171 + $0xb0] sm:$0xff]
        %v426 = vld [vmem:[%s171 + $0xb8] sm:$0xff]
        %v427 = vld [vmem:[%s171 + $0xc0] sm:$0xff]
        %v428 = vld [vmem:[%s171 + $0xc8] sm:$0xff]
        %v429 = vld [vmem:[%s171 + $0xd0] sm:$0xff]
        %v430 = vld [vmem:[%s171 + $0xd8] sm:$0xff]
        %v431 = vld [vmem:[%s171 + $0xe0] sm:$0xff]
        %v432 = vld [vmem:[%s171 + $0xe8] sm:$0xff]
        %v433 = vld [vmem:[%s171 + $0xf0] sm:$0xff]
        %v434 = vld [vmem:[%s171 + $0xf8] sm:$0xff]
        %v435 = vld [vmem:[%s171 + $0x100] sm:$0xff]
        %v436 = vld [vmem:[%s171 + $0x108] sm:$0xff]
        %v437 = vld [vmem:[%s171 + $0x110] sm:$0xff]
        %v438 = vld [vmem:[%s171 + $0x118] sm:$0xff]
        %v439 = vld [vmem:[%s171 + $0x120] sm:$0xff]
        %v440 = vld [vmem:[%s171 + $0x128] sm:$0xff]
        %v441 = vld [vmem:[%s171 + $0x130] sm:$0xff]
        %v442 = vld [vmem:[%s171 + $0x138] sm:$0xff]
        %v443 = vld [vmem:[%s171 + $0x140] sm:$0xff]
        %v444 = vld [vmem:[%s171 + $0x148] sm:$0xff]
        %v445 = vld [vmem:[%s171 + $0x150] sm:$0xff]
        %v446 = vld [vmem:[%s171 + $0x158] sm:$0xff]
        %v447 = vld [vmem:[%s171 + $0x160] sm:$0xff]
        %v448 = vld [vmem:[%s171 + $0x168] sm:$0xff]
        %v449 = vld [vmem:[%s171 + $0x170] sm:$0xff]
        %v450 = vld [vmem:[%s171 + $0x178] sm:$0xff]
        %v451 = vld [vmem:[%s171 + $0x180] sm:$0xff]
        %v452 = vld [vmem:[%s171 + $0x188] sm:$0xff]
        %v453 = vld [vmem:[%s171 + $0x190] sm:$0xff]
        %v454 = vld [vmem:[%s171 + $0x198] sm:$0xff]
        %v455 = vld [vmem:[%s171 + $0x1a0] sm:$0xff]
        %v456 = vld [vmem:[%s171 + $0x1a8] sm:$0xff]
        %v457 = vld [vmem:[%s171 + $0x1b0] sm:$0xff]
        %v458 = vld [vmem:[%s171 + $0x1b8] sm:$0xff]
        %v459 = vld [vmem:[%s171 + $0x1c0] sm:$0xff]
        %v460 = vld [vmem:[%s171 + $0x1c8] sm:$0xff]
        %v461 = vld [vmem:[%s171 + $0x1d0] sm:$0xff]
        %v462 = vld [vmem:[%s171 + $0x1d8] sm:$0xff]
        %v463 = vld [vmem:[%s171 + $0x1e0] sm:$0xff]
        %v464 = vld [vmem:[%s171 + $0x1e8] sm:$0xff]
        %v465 = vld [vmem:[%s171 + $0x1f0] sm:$0xff]
        %v466 = vld [vmem:[%s171 + $0x1f8] sm:$0xff]
        %v467 = vld [vmem:[%s171 + $0x200] sm:$0xff]
        %v468 = vld [vmem:[%s171 + $0x208] sm:$0xff]
        %v469 = vld [vmem:[%s171 + $0x210] sm:$0xff]
        %v470 = vld [vmem:[%s171 + $0x218] sm:$0xff]
        %v471 = vld [vmem:[%s171 + $0x220] sm:$0xff]
        %v472 = vld [vmem:[%s171 + $0x228] sm:$0xff]
        %v473 = vld [vmem:[%s171 + $0x230] sm:$0xff]
        %v474 = vld [vmem:[%s171 + $0x238] sm:$0xff]
        %v475 = vld [vmem:[%s171 + $0x240] sm:$0xff]
        %v476 = vld [vmem:[%s171 + $0x248] sm:$0xff]
        %v477 = vld [vmem:[%s171 + $0x250] sm:$0xff]
        %v478 = vld [vmem:[%s171 + $0x258] sm:$0xff]
        %v479 = vld [vmem:[%s171 + $0x260] sm:$0xff]
        %v480 = vld [vmem:[%s171 + $0x268] sm:$0xff]
        %v481 = vld [vmem:[%s171 + $0x270] sm:$0xff]
        %v482 = vld [vmem:[%s171 + $0x278] sm:$0xff]
        %v483 = vld [vmem:[%s171 + $0x280] sm:$0xff]
        %v484 = vld [vmem:[%s171 + $0x288] sm:$0xff]
        %v485 = vld [vmem:[%s171 + $0x290] sm:$0xff]
        %v486 = vld [vmem:[%s171 + $0x298] sm:$0xff]
        %v487 = vld [vmem:[%s171 + $0x2a0] sm:$0xff]
        %v488 = vld [vmem:[%s171 + $0x2a8] sm:$0xff]
        %v489 = vld [vmem:[%s171 + $0x2b0] sm:$0xff]
        %v490 = vld [vmem:[%s171 + $0x2b8] sm:$0xff]
        %v491 = vld [vmem:[%s171 + $0x2c0] sm:$0xff]
        %v492 = vld [vmem:[%s171 + $0x2c8] sm:$0xff]
        %v493 = vld [vmem:[%s171 + $0x2d0] sm:$0xff]
        %v494 = vld [vmem:[%s171 + $0x2d8] sm:$0xff]
        %v495 = vld [vmem:[%s171 + $0x2e0] sm:$0xff]
        %v496 = vld [vmem:[%s171 + $0x2e8] sm:$0xff]
        %v497 = vld [vmem:[%s171 + $0x2f0] sm:$0xff]
        %v498 = vld [vmem:[%s171 + $0x2f8] sm:$0xff]
        %v499 = vld [vmem:[%s171 + $0x300] sm:$0xff]
        %v500 = vld [vmem:[%s171 + $0x308] sm:$0xff]
        %v501 = vld [vmem:[%s171 + $0x310] sm:$0xff]
        %v502 = vld [vmem:[%s171 + $0x318] sm:$0xff]
        %v503 = vld [vmem:[%s171 + $0x320] sm:$0xff]
        %v504 = vld [vmem:[%s171 + $0x328] sm:$0xff]
        %v505 = vld [vmem:[%s171 + $0x330] sm:$0xff]
        %v506 = vld [vmem:[%s171 + $0x338] sm:$0xff]
        %v507 = vld [vmem:[%s171 + $0x340] sm:$0xff]
        %v508 = vld [vmem:[%s171 + $0x348] sm:$0xff]
        %v509 = vld [vmem:[%s171 + $0x350] sm:$0xff]
        %v510 = vld [vmem:[%s171 + $0x358] sm:$0xff]
        %v511 = vld [vmem:[%s171 + $0x360] sm:$0xff]
        %v512 = vld [vmem:[%s171 + $0x368] sm:$0xff]
        %v513 = vld [vmem:[%s171 + $0x370] sm:$0xff]
        %v514 = vld [vmem:[%s171 + $0x378] sm:$0xff]
        %v515 = vld [vmem:[%s171 + $0x380] sm:$0xff]
        %v516 = vld [vmem:[%s171 + $0x388] sm:$0xff]
        %v517 = vld [vmem:[%s171 + $0x390] sm:$0xff]
        %v518 = vld [vmem:[%s171 + $0x398] sm:$0xff]
        %v519 = vld [vmem:[%s171 + $0x3a0] sm:$0xff]
        %v520 = vld [vmem:[%s171 + $0x3a8] sm:$0xff]
        %v521 = vld [vmem:[%s171 + $0x3b0] sm:$0xff]
        %v522 = vld [vmem:[%s171 + $0x3b8] sm:$0xff]
        %v523 = vld [vmem:[%s171 + $0x3c0] sm:$0xff]
        %v524 = vld [vmem:[%s171 + $0x3c8] sm:$0xff]
        %v525 = vld [vmem:[%s171 + $0x3d0] sm:$0xff]
        %v526 = vld [vmem:[%s171 + $0x3d8] sm:$0xff]
        %v527 = vld [vmem:[%s171 + $0x3e0] sm:$0xff]
        %v528 = vld [vmem:[%s171 + $0x3e8] sm:$0xff]
        %v529 = vld [vmem:[%s171 + $0x3f0] sm:$0xff]
        %v530 = vld [vmem:[%s171 + $0x3f8] sm:$0xff]
        %v531 = vld [vmem:[%s171 + $0x400] sm:$0xff]
        %v532 = vld [vmem:[%s171 + $0x408] sm:$0xff]
        %v533 = vld [vmem:[%s171 + $0x410] sm:$0xff]
        %v534 = vld [vmem:[%s171 + $0x418] sm:$0xff]
        %v535 = vld [vmem:[%s171 + $0x420] sm:$0xff]
        %v536 = vld [vmem:[%s171 + $0x428] sm:$0xff]
        %v537 = vld [vmem:[%s171 + $0x430] sm:$0xff]
        %v538 = vld [vmem:[%s171 + $0x438] sm:$0xff]
        %v539 = vld [vmem:[%s171 + $0x440] sm:$0xff]
        %v540 = vld [vmem:[%s171 + $0x448] sm:$0xff]
        %v541 = vld [vmem:[%s171 + $0x450] sm:$0xff]
        %v542 = vld [vmem:[%s171 + $0x458] sm:$0xff]
        %v543 = vld [vmem:[%s171 + $0x460] sm:$0xff]
        %v544 = vld [vmem:[%s171 + $0x468] sm:$0xff]
        %v545 = vld [vmem:[%s171 + $0x470] sm:$0xff]
        %v546 = vld [vmem:[%s171 + $0x478] sm:$0xff]
        %v547 = vld [vmem:[%s171 + $0x480] sm:$0xff]
        %v548 = vld [vmem:[%s171 + $0x488] sm:$0xff]
        %v549 = vld [vmem:[%s171 + $0x490] sm:$0xff]
        %v550 = vld [vmem:[%s171 + $0x498] sm:$0xff]
        %v551 = vld [vmem:[%s171 + $0x4a0] sm:$0xff]
        %v552 = vld [vmem:[%s171 + $0x4a8] sm:$0xff]
        %v553 = vld [vmem:[%s171 + $0x4b0] sm:$0xff]
        %v554 = vld [vmem:[%s171 + $0x4b8] sm:$0xff]
        %v555 = vld [vmem:[%s171 + $0x4c0] sm:$0xff]
        %v556 = vld [vmem:[%s171 + $0x4c8] sm:$0xff]
        %v557 = vld [vmem:[%s171 + $0x4d0] sm:$0xff]
        %v558 = vld [vmem:[%s171 + $0x4d8] sm:$0xff]
        %v559 = vld [vmem:[%s171 + $0x4e0] sm:$0xff]
        %v560 = vld [vmem:[%s171 + $0x4e8] sm:$0xff]
        %v561 = vld [vmem:[%s171 + $0x4f0] sm:$0xff]
        %v562 = vld [vmem:[%s171 + $0x4f8] sm:$0xff]
        %v563 = vld [vmem:[%s171 + $0x500] sm:$0xff]
        %v564 = vld [vmem:[%s171 + $0x508] sm:$0xff]
        %v565 = vld [vmem:[%s171 + $0x510] sm:$0xff]
        %v566 = vld [vmem:[%s171 + $0x518] sm:$0xff]
        %v567 = vld [vmem:[%s171 + $0x520] sm:$0xff]
        %v568 = vld [vmem:[%s171 + $0x528] sm:$0xff]
        %v569 = vld [vmem:[%s171 + $0x530] sm:$0xff]
        %v570 = vld [vmem:[%s171 + $0x538] sm:$0xff]
        %v571 = vld [vmem:[%s171 + $0x540] sm:$0xff]
        %v572 = vld [vmem:[%s171 + $0x548] sm:$0xff]
        %v573 = vld [vmem:[%s171 + $0x550] sm:$0xff]
        %v574 = vld [vmem:[%s171 + $0x558] sm:$0xff]
        %v575 = vld [vmem:[%s171 + $0x560] sm:$0xff]
        %v576 = vld [vmem:[%s171 + $0x568] sm:$0xff]
        %v577 = vld [vmem:[%s171 + $0x570] sm:$0xff]
        %v578 = vld [vmem:[%s171 + $0x578] sm:$0xff]
        %v579 = vld [vmem:[%s171 + $0x580] sm:$0xff]
        %v580 = vld [vmem:[%s171 + $0x588] sm:$0xff]
        %v581 = vld [vmem:[%s171 + $0x590] sm:$0xff]
        %v582 = vld [vmem:[%s171 + $0x598] sm:$0xff]
        %v583 = vld [vmem:[%s171 + $0x5a0] sm:$0xff]
        %v584 = vld [vmem:[%s171 + $0x5a8] sm:$0xff]
        %v585 = vld [vmem:[%s171 + $0x5b0] sm:$0xff]
        %v586 = vld [vmem:[%s171 + $0x5b8] sm:$0xff]
        %v587 = vld [vmem:[%s171 + $0x5c0] sm:$0xff]
        %v588 = vld [vmem:[%s171 + $0x5c8] sm:$0xff]
        %v589 = vld [vmem:[%s171 + $0x5d0] sm:$0xff]
        %v590 = vld [vmem:[%s171 + $0x5d8] sm:$0xff]
        %v591 = vld [vmem:[%s171 + $0x5e0] sm:$0xff]
        %v592 = vld [vmem:[%s171 + $0x5e8] sm:$0xff]
        %v593 = vld [vmem:[%s171 + $0x5f0] sm:$0xff]
        %v594 = vld [vmem:[%s171 + $0x5f8] sm:$0xff]
        %v595 = vadd.f32 %v211, %v403
        %v596 = vadd.f32 %v212, %v404
        %v597 = vadd.f32 %v213, %v405
        %v598 = vadd.f32 %v214, %v406
        %v599 = vadd.f32 %v215, %v407
        %v600 = vadd.f32 %v216, %v408
        %v601 = vadd.f32 %v217, %v409
        %v602 = vadd.f32 %v218, %v410
        %v603 = vadd.f32 %v219, %v411
        %v604 = vadd.f32 %v220, %v412
        %v605 = vadd.f32 %v221, %v413
        %v606 = vadd.f32 %v222, %v414
        %v607 = vadd.f32 %v223, %v415
        %v608 = vadd.f32 %v224, %v416
        %v609 = vadd.f32 %v225, %v417
        %v610 = vadd.f32 %v226, %v418
        %v611 = vadd.f32 %v227, %v419
        %v612 = vadd.f32 %v228, %v420
        %v613 = vadd.f32 %v229, %v421
        %v614 = vadd.f32 %v230, %v422
        %v615 = vadd.f32 %v231, %v423
        %v616 = vadd.f32 %v232, %v424
        %v617 = vadd.f32 %v233, %v425
        %v618 = vadd.f32 %v234, %v426
        %v619 = vadd.f32 %v235, %v427
        %v620 = vadd.f32 %v236, %v428
        %v621 = vadd.f32 %v237, %v429
        %v622 = vadd.f32 %v238, %v430
        %v623 = vadd.f32 %v239, %v431
        %v624 = vadd.f32 %v240, %v432
        %v625 = vadd.f32 %v241, %v433
        %v626 = vadd.f32 %v242, %v434
        %v627 = vadd.f32 %v243, %v435
        %v628 = vadd.f32 %v244, %v436
        %v629 = vadd.f32 %v245, %v437
        %v630 = vadd.f32 %v246, %v438
        %v631 = vadd.f32 %v247, %v439
        %v632 = vadd.f32 %v248, %v440
        %v633 = vadd.f32 %v249, %v441
        %v634 = vadd.f32 %v250, %v442
        %v635 = vadd.f32 %v251, %v443
        %v636 = vadd.f32 %v252, %v444
        %v637 = vadd.f32 %v253, %v445
        %v638 = vadd.f32 %v254, %v446
        %v639 = vadd.f32 %v255, %v447
        %v640 = vadd.f32 %v256, %v448
        %v641 = vadd.f32 %v257, %v449
        %v642 = vadd.f32 %v258, %v450
        %v643 = vadd.f32 %v259, %v451
        %v644 = vadd.f32 %v260, %v452
        %v645 = vadd.f32 %v261, %v453
        %v646 = vadd.f32 %v262, %v454
        %v647 = vadd.f32 %v263, %v455
        %v648 = vadd.f32 %v264, %v456
        %v649 = vadd.f32 %v265, %v457
        %v650 = vadd.f32 %v266, %v458
        %v651 = vadd.f32 %v267, %v459
        %v652 = vadd.f32 %v268, %v460
        %v653 = vadd.f32 %v269, %v461
        %v654 = vadd.f32 %v270, %v462
        %v655 = vadd.f32 %v271, %v463
        %v656 = vadd.f32 %v272, %v464
        %v657 = vadd.f32 %v273, %v465
        %v658 = vadd.f32 %v274, %v466
        %v659 = vadd.f32 %v275, %v467
        %v660 = vadd.f32 %v276, %v468
        %v661 = vadd.f32 %v277, %v469
        %v662 = vadd.f32 %v278, %v470
        %v663 = vadd.f32 %v279, %v471
        %v664 = vadd.f32 %v280, %v472
        %v665 = vadd.f32 %v281, %v473
        %v666 = vadd.f32 %v282, %v474
        %v667 = vadd.f32 %v283, %v475
        %v668 = vadd.f32 %v284, %v476
        %v669 = vadd.f32 %v285, %v477
        %v670 = vadd.f32 %v286, %v478
        %v671 = vadd.f32 %v287, %v479
        %v672 = vadd.f32 %v288, %v480
        %v673 = vadd.f32 %v289, %v481
        %v674 = vadd.f32 %v290, %v482
        %v675 = vadd.f32 %v291, %v483
        %v676 = vadd.f32 %v292, %v484
        %v677 = vadd.f32 %v293, %v485
        %v678 = vadd.f32 %v294, %v486
        %v679 = vadd.f32 %v295, %v487
        %v680 = vadd.f32 %v296, %v488
        %v681 = vadd.f32 %v297, %v489
        %v682 = vadd.f32 %v298, %v490
        %v683 = vadd.f32 %v299, %v491
        %v684 = vadd.f32 %v300, %v492
        %v685 = vadd.f32 %v301, %v493
        %v686 = vadd.f32 %v302, %v494
        %v687 = vadd.f32 %v303, %v495
        %v688 = vadd.f32 %v304, %v496
        %v689 = vadd.f32 %v305, %v497
        %v690 = vadd.f32 %v306, %v498
        %v691 = vadd.f32 %v307, %v499
        %v692 = vadd.f32 %v308, %v500
        %v693 = vadd.f32 %v309, %v501
        %v694 = vadd.f32 %v310, %v502
        %v695 = vadd.f32 %v311, %v503
        %v696 = vadd.f32 %v312, %v504
        %v697 = vadd.f32 %v313, %v505
        %v698 = vadd.f32 %v314, %v506
        %v699 = vadd.f32 %v315, %v507
        %v700 = vadd.f32 %v316, %v508
        %v701 = vadd.f32 %v317, %v509
        %v702 = vadd.f32 %v318, %v510
        %v703 = vadd.f32 %v319, %v511
        %v704 = vadd.f32 %v320, %v512
        %v705 = vadd.f32 %v321, %v513
        %v706 = vadd.f32 %v322, %v514
        %v707 = vadd.f32 %v323, %v515
        %v708 = vadd.f32 %v324, %v516
        %v709 = vadd.f32 %v325, %v517
        %v710 = vadd.f32 %v326, %v518
        %v711 = vadd.f32 %v327, %v519
        %v712 = vadd.f32 %v328, %v520
        %v713 = vadd.f32 %v329, %v521
        %v714 = vadd.f32 %v330, %v522
        %v715 = vadd.f32 %v331, %v523
        %v716 = vadd.f32 %v332, %v524
        %v717 = vadd.f32 %v333, %v525
        %v718 = vadd.f32 %v334, %v526
        %v719 = vadd.f32 %v335, %v527
        %v720 = vadd.f32 %v336, %v528
        %v721 = vadd.f32 %v337, %v529
        %v722 = vadd.f32 %v338, %v530
        %v723 = vadd.f32 %v339, %v531
        %v724 = vadd.f32 %v340, %v532
        %v725 = vadd.f32 %v341, %v533
        %v726 = vadd.f32 %v342, %v534
        %v727 = vadd.f32 %v343, %v535
        %v728 = vadd.f32 %v344, %v536
        %v729 = vadd.f32 %v345, %v537
        %v730 = vadd.f32 %v346, %v538
        %v731 = vadd.f32 %v347, %v539
        %v732 = vadd.f32 %v348, %v540
        %v733 = vadd.f32 %v349, %v541
        %v734 = vadd.f32 %v350, %v542
        %v735 = vadd.f32 %v351, %v543
        %v736 = vadd.f32 %v352, %v544
        %v737 = vadd.f32 %v353, %v545
        %v738 = vadd.f32 %v354, %v546
        %v739 = vadd.f32 %v355, %v547
        %v740 = vadd.f32 %v356, %v548
        %v741 = vadd.f32 %v357, %v549
        %v742 = vadd.f32 %v358, %v550
        %v743 = vadd.f32 %v359, %v551
        %v744 = vadd.f32 %v360, %v552
        %v745 = vadd.f32 %v361, %v553
        %v746 = vadd.f32 %v362, %v554
        %v747 = vadd.f32 %v363, %v555
        %v748 = vadd.f32 %v364, %v556
        %v749 = vadd.f32 %v365, %v557
        %v750 = vadd.f32 %v366, %v558
        %v751 = vadd.f32 %v367, %v559
        %v752 = vadd.f32 %v368, %v560
        %v753 = vadd.f32 %v369, %v561
        %v754 = vadd.f32 %v370, %v562
        %v755 = vadd.f32 %v371, %v563
        %v756 = vadd.f32 %v372, %v564
        %v757 = vadd.f32 %v373, %v565
        %v758 = vadd.f32 %v374, %v566
        %v759 = vadd.f32 %v375, %v567
        %v760 = vadd.f32 %v376, %v568
        %v761 = vadd.f32 %v377, %v569
        %v762 = vadd.f32 %v378, %v570
        %v763 = vadd.f32 %v379, %v571
        %v764 = vadd.f32 %v380, %v572
        %v765 = vadd.f32 %v381, %v573
        %v766 = vadd.f32 %v382, %v574
        %v767 = vadd.f32 %v383, %v575
        %v768 = vadd.f32 %v384, %v576
        %v769 = vadd.f32 %v385, %v577
        %v770 = vadd.f32 %v386, %v578
        %v771 = vadd.f32 %v387, %v579
        %v772 = vadd.f32 %v388, %v580
        %v773 = vadd.f32 %v389, %v581
        %v774 = vadd.f32 %v390, %v582
        %v775 = vadd.f32 %v391, %v583
        %v776 = vadd.f32 %v392, %v584
        %v777 = vadd.f32 %v393, %v585
        %v778 = vadd.f32 %v394, %v586
        %v779 = vadd.f32 %v395, %v587
        %v780 = vadd.f32 %v396, %v588
        %v781 = vadd.f32 %v397, %v589
        %v782 = vadd.f32 %v398, %v590
        %v783 = vadd.f32 %v399, %v591
        %v784 = vadd.f32 %v400, %v592
        %v785 = vadd.f32 %v401, %v593
        %v786 = vadd.f32 %v402, %v594
        %787 = vst [vmem:[%s207] sm:$0xff] %v595
        %788 = vst [vmem:[%s207 + $0x8] sm:$0xff] %v596
        %789 = vst [vmem:[%s207 + $0x10] sm:$0xff] %v597
        %790 = vst [vmem:[%s207 + $0x18] sm:$0xff] %v598
        %791 = vst [vmem:[%s207 + $0x20] sm:$0xff] %v599
        %792 = vst [vmem:[%s207 + $0x28] sm:$0xff] %v600
        %793 = vst [vmem:[%s207 + $0x30] sm:$0xff] %v601
        %794 = vst [vmem:[%s207 + $0x38] sm:$0xff] %v602
        %795 = vst [vmem:[%s207 + $0x40] sm:$0xff] %v603
        %796 = vst [vmem:[%s207 + $0x48] sm:$0xff] %v604
        %797 = vst [vmem:[%s207 + $0x50] sm:$0xff] %v605
        %798 = vst [vmem:[%s207 + $0x58] sm:$0xff] %v606
        %799 = vst [vmem:[%s207 + $0x60] sm:$0xff] %v607
        %800 = vst [vmem:[%s207 + $0x68] sm:$0xff] %v608
        %801 = vst [vmem:[%s207 + $0x70] sm:$0xff] %v609
        %802 = vst [vmem:[%s207 + $0x78] sm:$0xff] %v610
        %803 = vst [vmem:[%s207 + $0x80] sm:$0xff] %v611
        %804 = vst [vmem:[%s207 + $0x88] sm:$0xff] %v612
        %805 = vst [vmem:[%s207 + $0x90] sm:$0xff] %v613
        %806 = vst [vmem:[%s207 + $0x98] sm:$0xff] %v614
        %807 = vst [vmem:[%s207 + $0xa0] sm:$0xff] %v615
        %808 = vst [vmem:[%s207 + $0xa8] sm:$0xff] %v616
        %809 = vst [vmem:[%s207 + $0xb0] sm:$0xff] %v617
        %810 = vst [vmem:[%s207 + $0xb8] sm:$0xff] %v618
        %811 = vst [vmem:[%s207 + $0xc0] sm:$0xff] %v619
        %812 = vst [vmem:[%s207 + $0xc8] sm:$0xff] %v620
        %813 = vst [vmem:[%s207 + $0xd0] sm:$0xff] %v621
        %814 = vst [vmem:[%s207 + $0xd8] sm:$0xff] %v622
        %815 = vst [vmem:[%s207 + $0xe0] sm:$0xff] %v623
        %816 = vst [vmem:[%s207 + $0xe8] sm:$0xff] %v624
        %817 = vst [vmem:[%s207 + $0xf0] sm:$0xff] %v625
        %818 = vst [vmem:[%s207 + $0xf8] sm:$0xff] %v626
        %819 = vst [vmem:[%s207 + $0x100] sm:$0xff] %v627
        %820 = vst [vmem:[%s207 + $0x108] sm:$0xff] %v628
        %821 = vst [vmem:[%s207 + $0x110] sm:$0xff] %v629
        %822 = vst [vmem:[%s207 + $0x118] sm:$0xff] %v630
        %823 = vst [vmem:[%s207 + $0x120] sm:$0xff] %v631
        %824 = vst [vmem:[%s207 + $0x128] sm:$0xff] %v632
        %825 = vst [vmem:[%s207 + $0x130] sm:$0xff] %v633
        %826 = vst [vmem:[%s207 + $0x138] sm:$0xff] %v634
        %827 = vst [vmem:[%s207 + $0x140] sm:$0xff] %v635
        %828 = vst [vmem:[%s207 + $0x148] sm:$0xff] %v636
        %829 = vst [vmem:[%s207 + $0x150] sm:$0xff] %v637
        %830 = vst [vmem:[%s207 + $0x158] sm:$0xff] %v638
        %831 = vst [vmem:[%s207 + $0x160] sm:$0xff] %v639
        %832 = vst [vmem:[%s207 + $0x168] sm:$0xff] %v640
        %833 = vst [vmem:[%s207 + $0x170] sm:$0xff] %v641
        %834 = vst [vmem:[%s207 + $0x178] sm:$0xff] %v642
        %835 = vst [vmem:[%s207 + $0x180] sm:$0xff] %v643
        %836 = vst [vmem:[%s207 + $0x188] sm:$0xff] %v644
        %837 = vst [vmem:[%s207 + $0x190] sm:$0xff] %v645
        %838 = vst [vmem:[%s207 + $0x198] sm:$0xff] %v646
        %839 = vst [vmem:[%s207 + $0x1a0] sm:$0xff] %v647
        %840 = vst [vmem:[%s207 + $0x1a8] sm:$0xff] %v648
        %841 = vst [vmem:[%s207 + $0x1b0] sm:$0xff] %v649
        %842 = vst [vmem:[%s207 + $0x1b8] sm:$0xff] %v650
        %843 = vst [vmem:[%s207 + $0x1c0] sm:$0xff] %v651
        %844 = vst [vmem:[%s207 + $0x1c8] sm:$0xff] %v652
        %845 = vst [vmem:[%s207 + $0x1d0] sm:$0xff] %v653
        %846 = vst [vmem:[%s207 + $0x1d8] sm:$0xff] %v654
        %847 = vst [vmem:[%s207 + $0x1e0] sm:$0xff] %v655
        %848 = vst [vmem:[%s207 + $0x1e8] sm:$0xff] %v656
        %849 = vst [vmem:[%s207 + $0x1f0] sm:$0xff] %v657
        %850 = vst [vmem:[%s207 + $0x1f8] sm:$0xff] %v658
        %851 = vst [vmem:[%s207 + $0x200] sm:$0xff] %v659
        %852 = vst [vmem:[%s207 + $0x208] sm:$0xff] %v660
        %853 = vst [vmem:[%s207 + $0x210] sm:$0xff] %v661
        %854 = vst [vmem:[%s207 + $0x218] sm:$0xff] %v662
        %855 = vst [vmem:[%s207 + $0x220] sm:$0xff] %v663
        %856 = vst [vmem:[%s207 + $0x228] sm:$0xff] %v664
        %857 = vst [vmem:[%s207 + $0x230] sm:$0xff] %v665
        %858 = vst [vmem:[%s207 + $0x238] sm:$0xff] %v666
        %859 = vst [vmem:[%s207 + $0x240] sm:$0xff] %v667
        %860 = vst [vmem:[%s207 + $0x248] sm:$0xff] %v668
        %861 = vst [vmem:[%s207 + $0x250] sm:$0xff] %v669
        %862 = vst [vmem:[%s207 + $0x258] sm:$0xff] %v670
        %863 = vst [vmem:[%s207 + $0x260] sm:$0xff] %v671
        %864 = vst [vmem:[%s207 + $0x268] sm:$0xff] %v672
        %865 = vst [vmem:[%s207 + $0x270] sm:$0xff] %v673
        %866 = vst [vmem:[%s207 + $0x278] sm:$0xff] %v674
        %867 = vst [vmem:[%s207 + $0x280] sm:$0xff] %v675
        %868 = vst [vmem:[%s207 + $0x288] sm:$0xff] %v676
        %869 = vst [vmem:[%s207 + $0x290] sm:$0xff] %v677
        %870 = vst [vmem:[%s207 + $0x298] sm:$0xff] %v678
        %871 = vst [vmem:[%s207 + $0x2a0] sm:$0xff] %v679
        %872 = vst [vmem:[%s207 + $0x2a8] sm:$0xff] %v680
        %873 = vst [vmem:[%s207 + $0x2b0] sm:$0xff] %v681
        %874 = vst [vmem:[%s207 + $0x2b8] sm:$0xff] %v682
        %875 = vst [vmem:[%s207 + $0x2c0] sm:$0xff] %v683
        %876 = vst [vmem:[%s207 + $0x2c8] sm:$0xff] %v684
        %877 = vst [vmem:[%s207 + $0x2d0] sm:$0xff] %v685
        %878 = vst [vmem:[%s207 + $0x2d8] sm:$0xff] %v686
        %879 = vst [vmem:[%s207 + $0x2e0] sm:$0xff] %v687
        %880 = vst [vmem:[%s207 + $0x2e8] sm:$0xff] %v688
        %881 = vst [vmem:[%s207 + $0x2f0] sm:$0xff] %v689
        %882 = vst [vmem:[%s207 + $0x2f8] sm:$0xff] %v690
        %883 = vst [vmem:[%s207 + $0x300] sm:$0xff] %v691
        %884 = vst [vmem:[%s207 + $0x308] sm:$0xff] %v692
        %885 = vst [vmem:[%s207 + $0x310] sm:$0xff] %v693
        %886 = vst [vmem:[%s207 + $0x318] sm:$0xff] %v694
        %887 = vst [vmem:[%s207 + $0x320] sm:$0xff] %v695
        %888 = vst [vmem:[%s207 + $0x328] sm:$0xff] %v696
        %889 = vst [vmem:[%s207 + $0x330] sm:$0xff] %v697
        %890 = vst [vmem:[%s207 + $0x338] sm:$0xff] %v698
        %891 = vst [vmem:[%s207 + $0x340] sm:$0xff] %v699
        %892 = vst [vmem:[%s207 + $0x348] sm:$0xff] %v700
        %893 = vst [vmem:[%s207 + $0x350] sm:$0xff] %v701
        %894 = vst [vmem:[%s207 + $0x358] sm:$0xff] %v702
        %895 = vst [vmem:[%s207 + $0x360] sm:$0xff] %v703
        %896 = vst [vmem:[%s207 + $0x368] sm:$0xff] %v704
        %897 = vst [vmem:[%s207 + $0x370] sm:$0xff] %v705
        %898 = vst [vmem:[%s207 + $0x378] sm:$0xff] %v706
        %899 = vst [vmem:[%s207 + $0x380] sm:$0xff] %v707
        %900 = vst [vmem:[%s207 + $0x388] sm:$0xff] %v708
        %901 = vst [vmem:[%s207 + $0x390] sm:$0xff] %v709
        %902 = vst [vmem:[%s207 + $0x398] sm:$0xff] %v710
        %903 = vst [vmem:[%s207 + $0x3a0] sm:$0xff] %v711
        %904 = vst [vmem:[%s207 + $0x3a8] sm:$0xff] %v712
        %905 = vst [vmem:[%s207 + $0x3b0] sm:$0xff] %v713
        %906 = vst [vmem:[%s207 + $0x3b8] sm:$0xff] %v714
        %907 = vst [vmem:[%s207 + $0x3c0] sm:$0xff] %v715
        %908 = vst [vmem:[%s207 + $0x3c8] sm:$0xff] %v716
        %909 = vst [vmem:[%s207 + $0x3d0] sm:$0xff] %v717
        %910 = vst [vmem:[%s207 + $0x3d8] sm:$0xff] %v718
        %911 = vst [vmem:[%s207 + $0x3e0] sm:$0xff] %v719
        %912 = vst [vmem:[%s207 + $0x3e8] sm:$0xff] %v720
        %913 = vst [vmem:[%s207 + $0x3f0] sm:$0xff] %v721
        %914 = vst [vmem:[%s207 + $0x3f8] sm:$0xff] %v722
        %915 = vst [vmem:[%s207 + $0x400] sm:$0xff] %v723
        %916 = vst [vmem:[%s207 + $0x408] sm:$0xff] %v724
        %917 = vst [vmem:[%s207 + $0x410] sm:$0xff] %v725
        %918 = vst [vmem:[%s207 + $0x418] sm:$0xff] %v726
        %919 = vst [vmem:[%s207 + $0x420] sm:$0xff] %v727
        %920 = vst [vmem:[%s207 + $0x428] sm:$0xff] %v728
        %921 = vst [vmem:[%s207 + $0x430] sm:$0xff] %v729
        %922 = vst [vmem:[%s207 + $0x438] sm:$0xff] %v730
        %923 = vst [vmem:[%s207 + $0x440] sm:$0xff] %v731
        %924 = vst [vmem:[%s207 + $0x448] sm:$0xff] %v732
        %925 = vst [vmem:[%s207 + $0x450] sm:$0xff] %v733
        %926 = vst [vmem:[%s207 + $0x458] sm:$0xff] %v734
        %927 = vst [vmem:[%s207 + $0x460] sm:$0xff] %v735
        %928 = vst [vmem:[%s207 + $0x468] sm:$0xff] %v736
        %929 = vst [vmem:[%s207 + $0x470] sm:$0xff] %v737
        %930 = vst [vmem:[%s207 + $0x478] sm:$0xff] %v738
        %931 = vst [vmem:[%s207 + $0x480] sm:$0xff] %v739
        %932 = vst [vmem:[%s207 + $0x488] sm:$0xff] %v740
        %933 = vst [vmem:[%s207 + $0x490] sm:$0xff] %v741
        %934 = vst [vmem:[%s207 + $0x498] sm:$0xff] %v742
        %935 = vst [vmem:[%s207 + $0x4a0] sm:$0xff] %v743
        %936 = vst [vmem:[%s207 + $0x4a8] sm:$0xff] %v744
        %937 = vst [vmem:[%s207 + $0x4b0] sm:$0xff] %v745
        %938 = vst [vmem:[%s207 + $0x4b8] sm:$0xff] %v746
        %939 = vst [vmem:[%s207 + $0x4c0] sm:$0xff] %v747
        %940 = vst [vmem:[%s207 + $0x4c8] sm:$0xff] %v748
        %941 = vst [vmem:[%s207 + $0x4d0] sm:$0xff] %v749
        %942 = vst [vmem:[%s207 + $0x4d8] sm:$0xff] %v750
        %943 = vst [vmem:[%s207 + $0x4e0] sm:$0xff] %v751
        %944 = vst [vmem:[%s207 + $0x4e8] sm:$0xff] %v752
        %945 = vst [vmem:[%s207 + $0x4f0] sm:$0xff] %v753
        %946 = vst [vmem:[%s207 + $0x4f8] sm:$0xff] %v754
        %947 = vst [vmem:[%s207 + $0x500] sm:$0xff] %v755
        %948 = vst [vmem:[%s207 + $0x508] sm:$0xff] %v756
        %949 = vst [vmem:[%s207 + $0x510] sm:$0xff] %v757
        %950 = vst [vmem:[%s207 + $0x518] sm:$0xff] %v758
        %951 = vst [vmem:[%s207 + $0x520] sm:$0xff] %v759
        %952 = vst [vmem:[%s207 + $0x528] sm:$0xff] %v760
        %953 = vst [vmem:[%s207 + $0x530] sm:$0xff] %v761
        %954 = vst [vmem:[%s207 + $0x538] sm:$0xff] %v762
        %955 = vst [vmem:[%s207 + $0x540] sm:$0xff] %v763
        %956 = vst [vmem:[%s207 + $0x548] sm:$0xff] %v764
        %957 = vst [vmem:[%s207 + $0x550] sm:$0xff] %v765
        %958 = vst [vmem:[%s207 + $0x558] sm:$0xff] %v766
        %959 = vst [vmem:[%s207 + $0x560] sm:$0xff] %v767
        %960 = vst [vmem:[%s207 + $0x568] sm:$0xff] %v768
        %961 = vst [vmem:[%s207 + $0x570] sm:$0xff] %v769
        %962 = vst [vmem:[%s207 + $0x578] sm:$0xff] %v770
        %963 = vst [vmem:[%s207 + $0x580] sm:$0xff] %v771
        %964 = vst [vmem:[%s207 + $0x588] sm:$0xff] %v772
        %965 = vst [vmem:[%s207 + $0x590] sm:$0xff] %v773
        %966 = vst [vmem:[%s207 + $0x598] sm:$0xff] %v774
        %967 = vst [vmem:[%s207 + $0x5a0] sm:$0xff] %v775
        %968 = vst [vmem:[%s207 + $0x5a8] sm:$0xff] %v776
        %969 = vst [vmem:[%s207 + $0x5b0] sm:$0xff] %v777
        %970 = vst [vmem:[%s207 + $0x5b8] sm:$0xff] %v778
        %971 = vst [vmem:[%s207 + $0x5c0] sm:$0xff] %v779
        %972 = vst [vmem:[%s207 + $0x5c8] sm:$0xff] %v780
        %973 = vst [vmem:[%s207 + $0x5d0] sm:$0xff] %v781
        %974 = vst [vmem:[%s207 + $0x5d8] sm:$0xff] %v782
        %975 = vst [vmem:[%s207 + $0x5e0] sm:$0xff] %v783
        %976 = vst [vmem:[%s207 + $0x5e8] sm:$0xff] %v784
        %977 = vst [vmem:[%s207 + $0x5f0] sm:$0xff] %v785
        %978 = vst [vmem:[%s207 + $0x5f8] sm:$0xff] %v786
        %s979 = sand.u32 %s82, 1
        %s980 = scalar_lea.sflag [#allocation4], %s979
        %s981 = sand.u32 %s82, 1
        %s982 = smul.addr %s981, 1536
        %s983 = scalar_lea.vmem [#allocation7], %s982
        // Predicated region
        $region37: #{tpu_custom_call.1} parent=27 // pred_check
          %p984 = pneg %p92
        $region38: #{tpu_custom_call.1} parent=27 // pred_check_branch
          %986 = sbr.rel (%p984) target = $region40
        $region39: #{tpu_custom_call.1} parent=27 // pred_region
          %s987 = smul.u32 3, %s22
          %989 = vsyncadd %s980, 0
          %s990 = smul.addr %s987, 64
          %s991 = smul.addr %s990, 8
          %s992 = scalar_lea.hbm %s2, %s991
          %s993 = sshll.u32 %s983, 4
          %s994 = int_to_ptr.vmem [resolvable:$true] %s993
          %s995 = sshll.u32 %s992, 4
          %s996 = int_to_ptr.hbm [resolvable:$true] %s995
          %1001 = dma.vmem_to_hbm [thread:$0]  %s994, 24576, %s996, %s980, 8192, 8192, 512
        $region40: #{tpu_custom_call.1} parent=27 // pred_fallthru
          _
      $region28: #{tpu_custom_call.1} parent=5 // pred_fallthru
        _
      %p1002 = scmp.le.s32.totalorder 2, %s17
      // Predicated region
      $region41: #{tpu_custom_call.1} parent=5 // pred_check
        %p1003 = pneg %p1002
      $region42: #{tpu_custom_call.1} parent=5 // pred_check_branch
        %1005 = sbr.rel (%p1003) target = $region44
      $region43: #{tpu_custom_call.1} parent=5 // pred_region
        %s1006 = ssub.s32 %s17, 2
        // Predicated region
        $region45: #{tpu_custom_call.1} parent=43 // pred_check
          %p1007 = pneg %p98
        $region46: #{tpu_custom_call.1} parent=43 // pred_check_branch
          %1009 = sbr.rel (%p1007) target = $region48
        $region47: #{tpu_custom_call.1} parent=43 // pred_region
          %s1010 = sand.u32 %s83, 1
          %s1011 = scalar_lea.sflag [#allocation4], %s1010
          %s1012 = sand.u32 %s83, 1
          %s1013 = smul.addr %s1012, 1536
          %s1014 = scalar_lea.vmem [#allocation7], %s1013
          %1016 = dma.done %s1011, 24576
        $region48: #{tpu_custom_call.1} parent=43 // pred_fallthru
          _
      $region44: #{tpu_custom_call.1} parent=5 // pred_fallthru
        _
    $region6: #{tpu_custom_call.1} parent=1 // loop_footer
      %s21 = sadd.s32 1, %s17
    $region7: #{tpu_custom_call.1} parent=1 // loop_footer_branch
      %16 = sbr.rel target = $region3
    $region8: #{tpu_custom_call.1} parent=1 // loop_exit
      _
    %1017 = vsyncpa [#allocation3], 1
    %s1018 = scalar_lea.sflag [#allocation3], 1
    %1019 = vsyncpa %s1018, 1
    %1020 = vsyncpa [#allocation6], 1
    %s1021 = scalar_lea.sflag [#allocation6], 1
    %1022 = vsyncpa %s1021, 1
    %1023 = vsyncpa [#allocation4], 1
    %s1024 = scalar_lea.sflag [#allocation4], 1
    %1025 = vsyncpa %s1024, 1

</llo_original>
